<compile_context>
chip_gen: v5e
topology: v5e:2x2
jax: 0.10.0
libtpu: 0.0.40
codegen_flags: <defaults>
</compile_context>

<pallas_src>
import functools

import numpy as np
import jax
import jax.numpy as jnp
from jax import lax
from jax.experimental import pallas as pl
from jax.experimental.pallas import tpu as pltpu


# ---------------------------------------------------------------- kernel
def _cosine_sim_kernel(x_ref, y_ref, o_ref, *, inv_temp, eps2):
    # x_ref, y_ref: (TN, D) f32 row tiles; o_ref: (TN, 1) f32
    x = x_ref[...]
    y = y_ref[...]
    dot = jnp.sum(x * y, axis=-1, keepdims=True)           # (TN, 1)
    nx2 = jnp.sum(x * x, axis=-1, keepdims=True)           # (TN, 1)
    ny2 = jnp.sum(y * y, axis=-1, keepdims=True)           # (TN, 1)
    # ATen cosine_similarity: dot / sqrt(max(nx2 * ny2, eps^2))  (EUP rsqrt)
    inv_den = lax.rsqrt(jnp.maximum(nx2 * ny2, eps2))
    o_ref[...] = dot * inv_den * inv_temp


def _round_up(v, m):
    return ((v + m - 1) // m) * m


# ---------------------------------------------------------------- wrapper
def similarity(x, y, temp, *, eps=1e-8, max_block_rows=1024,
               vmem_budget_bytes=8 << 20):
    """Pallas equivalent of Similarity.forward: cosine_similarity(x, y, -1) / temp."""
    x, y = jnp.broadcast_arrays(x, y)                       # PyTorch broadcast semantics
    x = x.astype(jnp.float32)
    y = y.astype(jnp.float32)
    *lead, D = x.shape
    lead = tuple(lead)
    N = int(np.prod(lead)) if lead else 1

    x2 = x.reshape(N, D)
    y2 = y.reshape(N, D)

    # Pick a row-tile size: single block for small N, otherwise the biggest
    # multiple of 8 whose double-buffered inputs fit the VMEM budget.
    if N <= max_block_rows:
        TN = _round_up(max(N, 1), 8)
    else:
        # 2 operands * 2 pipeline buffers * TN * D * 4 bytes <= budget
        fit = max(vmem_budget_bytes // (2 * 2 * max(D, 1) * 4), 8)
        TN = min(max_block_rows, _round_up(min(fit, N), 8))
        TN = max(8, (TN // 8) * 8)

    n_blocks = pl.cdiv(N, TN)
    Np = n_blocks * TN
    if Np != N:
        pad = Np - N
        x2 = jnp.pad(x2, ((0, pad), (0, 0)))                # zero rows -> eps clamp, no NaN
        y2 = jnp.pad(y2, ((0, pad), (0, 0)))

    kernel = functools.partial(
        _cosine_sim_kernel,
        inv_temp=float(1.0 / temp),
        eps2=float(eps) * float(eps),
    )

    out = pl.pallas_call(
        kernel,
        grid=(n_blocks,),
        in_specs=[
            pl.BlockSpec((TN, D), lambda i: (i, 0)),
            pl.BlockSpec((TN, D), lambda i: (i, 0)),
        ],
        out_specs=pl.BlockSpec((TN, 1), lambda i: (i, 0)),
        out_shape=jax.ShapeDtypeStruct((Np, 1), jnp.float32),
        compiler_params=pltpu.CompilerParams(
            dimension_semantics=("parallel",),
        ),
    )(x2, y2)

    return out[:N, 0].reshape(lead)


# ----------------------------------------------------------- pure-JAX ref
def reference_similarity(x, y, temp, eps=1e-8):
    x, y = jnp.broadcast_arrays(x, y)
    x = x.astype(jnp.float32)
    y = y.astype(jnp.float32)
    dot = jnp.sum(x * y, axis=-1)
    nx2 = jnp.sum(x * x, axis=-1)
    ny2 = jnp.sum(y * y, axis=-1)
    den = jnp.sqrt(jnp.maximum(nx2 * ny2, eps * eps))
    return dot / den / temp


# ---------------------------------------------------------------- main
if __name__ == "__main__":
    key = jax.random.PRNGKey(0)
    kx, ky, kz1, kz2 = jax.random.split(key, 4)

    temp = 0.05  # typical SimCSE temperature

    # Case 1: same-shape inputs (batch=2, seq=8, hidden=32) -> (2, 8)
    B, S, D = 2, 8, 32
    x = jax.random.normal(kx, (B, S, D), jnp.float32)
    y = jax.random.normal(ky, (B, S, D), jnp.float32)
    out1 = jax.block_until_ready(similarity(x, y, temp))
    ref1 = reference_similarity(x, y, temp)
    np.testing.assert_allclose(np.asarray(out1), np.asarray(ref1),
                               rtol=1e-4, atol=1e-4)

    # Case 2: broadcast (SimCSE usage): (M,1,D) vs (1,M,D) -> (M, M)
    M = 16
    z1 = jax.random.normal(kz1, (M, 1, D), jnp.float32)
    z2 = jax.random.normal(kz2, (1, M, D), jnp.float32)
    out2 = jax.block_until_ready(similarity(z1, z2, temp))
    ref2 = reference_similarity(z1, z2, temp)
    np.testing.assert_allclose(np.asarray(out2), np.asarray(ref2),
                               rtol=1e-4, atol=1e-4)

    print("KERNEL_OK")
</pallas_src>

<mosaic_0001>
module attributes {stable_mosaic.version = 11 : i64} {
  func.func @_cosine_sim_kernel(%arg0: i32, %arg1: memref<16x32xf32, #tpu.memory_space<vmem>>, %arg2: memref<16x32xf32, #tpu.memory_space<vmem>>, %arg3: memref<16x1xf32, #tpu.memory_space<vmem>>) attributes {dimension_semantics = [#tpu.dimension_semantics<parallel>], iteration_bounds = array<i64: 1>, scalar_prefetch = 0 : i64, scratch_operands = 0 : i64, tpu.core_type = #tpu.core_type<tc>, window_params = [{transform_indices = @transform_0, window_bounds = array<i64: 16, 32>}, {transform_indices = @transform_1, window_bounds = array<i64: 16, 32>}, {transform_indices = @transform_2, window_bounds = array<i64: 16, 1>}]} {
    %c0 = arith.constant 0 : index
    %c0_0 = arith.constant 0 : index
    %0 = vector.load %arg1[%c0, %c0_0] : memref<16x32xf32, #tpu.memory_space<vmem>>, vector<16x32xf32>
    %c0_1 = arith.constant 0 : index
    %c0_2 = arith.constant 0 : index
    %1 = vector.load %arg2[%c0_1, %c0_2] : memref<16x32xf32, #tpu.memory_space<vmem>>, vector<16x32xf32>
    %2 = arith.mulf %0, %1 : vector<16x32xf32>
    %cst = arith.constant dense<0.000000e+00> : vector<16xf32>
    %3 = vector.multi_reduction <add>, %2, %cst [1] : vector<16x32xf32> to vector<16xf32>
    %4 = vector.shape_cast %3 : vector<16xf32> to vector<16x1xf32>
    %5 = arith.mulf %0, %0 : vector<16x32xf32>
    %cst_3 = arith.constant dense<0.000000e+00> : vector<16xf32>
    %6 = vector.multi_reduction <add>, %5, %cst_3 [1] : vector<16x32xf32> to vector<16xf32>
    %7 = vector.shape_cast %6 : vector<16xf32> to vector<16x1xf32>
    %8 = arith.mulf %1, %1 : vector<16x32xf32>
    %cst_4 = arith.constant dense<0.000000e+00> : vector<16xf32>
    %9 = vector.multi_reduction <add>, %8, %cst_4 [1] : vector<16x32xf32> to vector<16xf32>
    %10 = vector.shape_cast %9 : vector<16xf32> to vector<16x1xf32>
    %11 = arith.mulf %7, %10 : vector<16x1xf32>
    %cst_5 = arith.constant 1.000000e-16 : f32
    %12 = vector.broadcast %cst_5 : f32 to vector<16x1xf32>
    %13 = arith.maximumf %11, %12 : vector<16x1xf32>
    %14 = math.rsqrt %13 : vector<16x1xf32>
    %15 = arith.mulf %4, %14 : vector<16x1xf32>
    %cst_6 = arith.constant 2.000000e+01 : f32
    %16 = vector.broadcast %cst_6 : f32 to vector<16x1xf32>
    %17 = arith.mulf %15, %16 : vector<16x1xf32>
    %c0_7 = arith.constant 0 : index
    %c0_8 = arith.constant 0 : index
    %18 = vector.load %arg3[%c0_7, %c0_8] : memref<16x1xf32, #tpu.memory_space<vmem>>, vector<16x1xf32>
    tpu.vector_store %arg3[%c0_7, %c0_8], %17 {strides = array<i32>} : memref<16x1xf32, #tpu.memory_space<vmem>>, vector<16x1xf32>,
    return
  }
  func.func @transform_0(%arg0: i32) -> (i32, i32) {
    %c0_i32 = arith.constant 0 : i32
    %c0_i32_0 = arith.constant 0 : i32
    return %arg0, %c0_i32 : i32, i32
  }
  func.func @transform_1(%arg0: i32) -> (i32, i32) {
    %c0_i32 = arith.constant 0 : i32
    %c0_i32_0 = arith.constant 0 : i32
    return %arg0, %c0_i32 : i32, i32
  }
  func.func @transform_2(%arg0: i32) -> (i32, i32) {
    %c0_i32 = arith.constant 0 : i32
    %c0_i32_0 = arith.constant 0 : i32
    return %arg0, %c0_i32 : i32, i32
  }
}

</mosaic_0001>

<llo_original>
// kernel: tpu_custom_call.1
$region0: #{tpu_custom_call.1}
  #allocation0 [shape = 'u32[]', space=smem, size = 0x4, offset = 0x4, fixed_abs, tag = 'smem constant byte address 0x4 - core index']
  #allocation1 [shape = 'u32[72,128]{1,0:T(1,128)}', space=vmem, size = 0x9000, scoped, tag = 'internal scratch']
  %s0 = inlined_call_operand.hbm [shape: f32[16,32], index: 0, kind: input, shape index: {}]
  %s1 = inlined_call_operand.hbm [shape: f32[16,32], index: 1, kind: input, shape index: {}]
  %s2 = inlined_call_operand.vmem [shape: f32[16,1], index: 2, kind: output, shape index: {}]
  %s3 = sld [smem:[#allocation0]]
  $region26: #{tpu_custom_call.1} parent=0
    _
  %s5 = ssub.s32 1, %s3
  %s6 = scalar_select 0, %s5, %s3
  $region1: #{tpu_custom_call.1} parent=0
    #allocation2 [shape = 'u8[8192]{0}', space=vmem, size = 0x2000, scoped, tag = 'input window, operand 0, single buffered']
    #allocation3 [shape = 's32[1]{0}', space=sflag, size = 0x4, scoped, tag = 'scoped memory for tpu_custom_call.1']
    #allocation4 [shape = 'u8[8192]{0}', space=vmem, size = 0x2000, scoped, tag = 'input window, operand 1, single buffered']
    #allocation5 [shape = 's32[1]{0}', space=sflag, size = 0x4, scoped, tag = 'scoped memory for tpu_custom_call.1']
    %7 = vsyncpa [#allocation3], 0
    %8 = vsyncpa [#allocation5], 0
    // Predicated region
    $region2: #{tpu_custom_call.1} parent=1 // pred_check
      _
    $region3: #{tpu_custom_call.1} parent=1 // pred_check_branch
      %10 = sbr.rel (0) target = $region5
    $region4: #{tpu_custom_call.1} parent=1 // pred_region
      %12 = vsyncadd [#allocation3], 0
      %s13 = sshll.u32 %s0, 4
      %s14 = int_to_ptr.hbm [resolvable:$true] %s13
      %s15 = sshll.u32 [#allocation2], 4
      %s16 = int_to_ptr.vmem [resolvable:$true] %s15
      %21 = dma.hbm_to_vmem [thread:$0]  %s14, 256, %s16, [#allocation3], 128, 128, 8
    $region5: #{tpu_custom_call.1} parent=1 // pred_fallthru
      _
    // Predicated region
    $region6: #{tpu_custom_call.1} parent=1 // pred_check
      _
    $region7: #{tpu_custom_call.1} parent=1 // pred_check_branch
      %23 = sbr.rel (0) target = $region9
    $region8: #{tpu_custom_call.1} parent=1 // pred_region
      %25 = vsyncadd [#allocation5], 0
      %s26 = sshll.u32 %s1, 4
      %s27 = int_to_ptr.hbm [resolvable:$true] %s26
      %s28 = sshll.u32 [#allocation4], 4
      %s29 = int_to_ptr.vmem [resolvable:$true] %s28
      %34 = dma.hbm_to_vmem [thread:$0]  %s27, 256, %s29, [#allocation5], 128, 128, 8
    $region9: #{tpu_custom_call.1} parent=1 // pred_fallthru
      _
    // Predicated region
    $region10: #{tpu_custom_call.1} parent=1 // pred_check
      _
    $region11: #{tpu_custom_call.1} parent=1 // pred_check_branch
      %36 = sbr.rel (0) target = $region13
    $region12: #{tpu_custom_call.1} parent=1 // pred_region
      %38 = dma.done [#allocation3], 256
    $region13: #{tpu_custom_call.1} parent=1 // pred_fallthru
      _
    // Predicated region
    $region14: #{tpu_custom_call.1} parent=1 // pred_check
      _
    $region15: #{tpu_custom_call.1} parent=1 // pred_check_branch
      %40 = sbr.rel (0) target = $region17
    $region16: #{tpu_custom_call.1} parent=1 // pred_region
      %42 = dma.done [#allocation5], 256
    $region17: #{tpu_custom_call.1} parent=1 // pred_fallthru
      _
    %v43 = vld [vmem:[#allocation2] sm:$0xff]
    %v44 = vld [vmem:[#allocation2 + $0x8] sm:$0xff]
    %v45 = vld [vmem:[#allocation4] sm:$0xff]
    %v46 = vld [vmem:[#allocation4 + $0x8] sm:$0xff]
    %v47 = vmul.f32 %v43, %v45
    %v48 = vmul.f32 %v44, %v46
    %vm49 = vcmask 261120
    %v50 = vsel %vm49, %v47, 0.0
    %51 = vadd.xlane.f32.xlu0 %v50
    %v52 = vpop.xlane.xlu0 %51
    %v53 = vsel %vm49, %v48, 0.0
    %54 = vadd.xlane.f32.xlu0 %v53
    %v55 = vpop.xlane.xlu0 %54
    %v56 = vmul.f32 %v43, %v43
    %v57 = vmul.f32 %v44, %v44
    %v58 = vsel %vm49, %v56, 0.0
    %59 = vadd.xlane.f32.xlu0 %v58
    %v60 = vpop.xlane.xlu0 %59
    %v61 = vsel %vm49, %v57, 0.0
    %62 = vadd.xlane.f32.xlu0 %v61
    %v63 = vpop.xlane.xlu0 %62
    %v64 = vmul.f32 %v45, %v45
    %v65 = vmul.f32 %v46, %v46
    %v66 = vsel %vm49, %v64, 0.0
    %67 = vadd.xlane.f32.xlu0 %v66
    %v68 = vpop.xlane.xlu0 %67
    %v69 = vsel %vm49, %v65, 0.0
    %70 = vadd.xlane.f32.xlu0 %v69
    %v71 = vpop.xlane.xlu0 %70
    %v72 = vmul.f32 %v60, %v68
    %v73 = vmul.f32 %v63, %v71
    %v74 = vmax.f32 %v72, 1e-16
    %v75 = vmax.f32 %v73, 1e-16
    %v76 = vrsqrt.pop %v74
    %v77 = vmul.f32 %v76, %v74
    %v78 = vmul.f32 %v77, %v76
    %v79 = vmul.f32 0.5, %v78
    %v80 = vsub.f32 1.5, %v79
    %v81 = vmul.f32 %v76, %v80
    %vm82 = vweird.f32 %v74
    %vm83 = vweird.f32 %v76
    %vm84 = vmor %vm82, %vm83
    %v85 = vsel %vm84, %v76, %v81
    %v86 = vrsqrt.pop %v75
    %v87 = vmul.f32 %v86, %v75
    %v88 = vmul.f32 %v87, %v86
    %v89 = vmul.f32 0.5, %v88
    %v90 = vsub.f32 1.5, %v89
    %v91 = vmul.f32 %v86, %v90
    %vm92 = vweird.f32 %v75
    %vm93 = vweird.f32 %v86
    %vm94 = vmor %vm92, %vm93
    %v95 = vsel %vm94, %v86, %v91
    %v96 = vmul.f32 %v52, %v85
    %v97 = vmul.f32 %v55, %v95
    %v98 = vmul.f32 %v96, 20.0
    %v99 = vmul.f32 %v97, 20.0
    %vm100 = vcmask 7168
    %101 = vst.msk [vmem:[%s2] sm:$0xff] %vm100, %v98
    %102 = vst.msk [vmem:[%s2 + $0x8] sm:$0xff] %vm100, %v99
    // Predicated region
    $region18: #{tpu_custom_call.1} parent=1 // pred_check
      _
    $region19: #{tpu_custom_call.1} parent=1 // pred_check_branch
      %104 = sbr.rel (0) target = $region21
    $region20: #{tpu_custom_call.1} parent=1 // pred_region
      _
    $region21: #{tpu_custom_call.1} parent=1 // pred_fallthru
      _
    // Predicated region
    $region22: #{tpu_custom_call.1} parent=1 // pred_check
      _
    $region23: #{tpu_custom_call.1} parent=1 // pred_check_branch
      %106 = sbr.rel (0) target = $region25
    $region24: #{tpu_custom_call.1} parent=1 // pred_region
      _
    $region25: #{tpu_custom_call.1} parent=1 // pred_fallthru
      _
    %107 = vsyncpa [#allocation3], 1
    %108 = vsyncpa [#allocation5], 1

</llo_original>
